<compile_context>
chip_gen: v5e
topology: v5e:2x2
jax: 0.10.0
libtpu: 0.0.40
codegen_flags: <defaults>
</compile_context>

<pallas_src>
import jax
import jax.numpy as jnp
from jax.experimental import pallas as pl
from jax.experimental.pallas import tpu as pltpu


def _round_up(n: int, m: int) -> int:
    return (n + m - 1) // m * m


def _cdiv(a: int, b: int) -> int:
    return (a + b - 1) // b


def duel_network_forward(x, w1a, b1a, w2a, b2a, w1v, b1v, w2v, b2v,
                         *, block_b: int = 1024,
                         compute_dtype=jnp.bfloat16,
                         out_dtype=jnp.float32):
    """DuelNetwork forward.

    x:   (B, input_size)
    w1a: (input_size, hidden) b1a: (hidden,)   w2a: (hidden, output) b2a: (output,)
    w1v: (input_size, hidden) b1v: (hidden,)   w2v: (hidden, 1)      b2v: (1,)
    Returns q of shape (B, output_size) in out_dtype.
    """
    B, D = x.shape
    H = w1a.shape[1]
    O = w2a.shape[1]
    assert w2v.shape == (H, 1)

    f32 = jnp.float32
    H_pad = _round_up(H, 128)
    O_pad = _round_up(O, 128)
    H2 = 2 * H_pad

    # Batch tile: sublane-aligned for compute_dtype; capped so that when B is large enough
    # there are >= 2 grid steps ("parallel" only shards across v7x's 2 TCs with >= 2 tiles).
    sub = 16 if jnp.dtype(compute_dtype) == jnp.dtype(jnp.bfloat16) else 8
    tb = _round_up(min(block_b, B), sub)
    if _cdiv(B, tb) < 2 and B > sub:
        tb = _round_up(_cdiv(B, 2), sub)
    n_tiles = _cdiv(B, tb)

    # ---- weight preparation (all padding lanes/rows are zero; algebra is exact) ----
    # First layer: [W1a | W1v], each zero-padded to H_pad hidden columns.
    w1 = jnp.zeros((D, H2), compute_dtype)
    w1 = w1.at[:, :H].set(w1a.astype(compute_dtype))
    w1 = w1.at[:, H_pad:H_pad + H].set(w1v.astype(compute_dtype))
    b1 = jnp.zeros((1, H2), f32)
    b1 = b1.at[0, :H].set(b1a.astype(f32))
    b1 = b1.at[0, H_pad:H_pad + H].set(b1v.astype(f32))

    # Second layer: fold the dueling mean into the advantage head, replicate the 1-wide
    # value column across all O_pad lanes, stack both heads along the contraction dim.
    w2a_c = (w2a.astype(f32) - w2a.astype(f32).mean(axis=1, keepdims=True))
    b2a_c = (b2a.astype(f32) - b2a.astype(f32).mean())
    w2 = jnp.zeros((H2, O_pad), compute_dtype)
    w2 = w2.at[:H, :O].set(w2a_c.astype(compute_dtype))
    w2 = w2.at[H_pad:H_pad + H, :].set(jnp.tile(w2v.astype(compute_dtype), (1, O_pad)))
    b2 = jnp.full((1, O_pad), b2v.astype(f32)[0])
    b2 = b2.at[0, :O].add(b2a_c)

    # x: only a dtype cast; no batch padding, no feature padding, no extra HBM copy.
    x_c = x.astype(compute_dtype)

    def kernel(x_ref, w1_ref, b1_ref, w2_ref, b2_ref, out_ref):
        h = jnp.dot(x_ref[...], w1_ref[...],
                    preferred_element_type=jnp.float32) + b1_ref[...]
        h = jnp.maximum(h, 0.0)
        q = jnp.dot(h.astype(w2_ref.dtype), w2_ref[...],
                    preferred_element_type=jnp.float32) + b2_ref[...]
        out_ref[...] = q.astype(out_ref.dtype)

    in_specs = [
        pl.BlockSpec((tb, D), lambda i: (i, 0)),        # x: streamed over batch (ragged ok)
        pl.BlockSpec((D, H2), lambda i: (0, 0)),        # fused W1 (VMEM-resident)
        pl.BlockSpec((1, H2), lambda i: (0, 0)),        # fused b1 (resident)
        pl.BlockSpec((H2, O_pad), lambda i: (0, 0)),    # fused W2 (resident)
        pl.BlockSpec((1, O_pad), lambda i: (0, 0)),     # fused b2 (resident)
    ]
    out_specs = pl.BlockSpec((tb, O_pad), lambda i: (i, 0))

    # VMEM budget: streamed blocks (double-buffered) + resident weights + f32 intermediates.
    cb = jnp.dtype(compute_dtype).itemsize
    ob = jnp.dtype(out_dtype).itemsize
    vmem_bytes = (
        2 * tb * D * cb                        # x block, double-buffered
        + 2 * tb * O_pad * ob                  # out block, double-buffered
        + 2 * (D * H2 * cb + H2 * 4)           # W1 / b1 (default buffering)
        + 2 * (H2 * O_pad * cb + O_pad * 4)    # W2 / b2
        + tb * H2 * 4 + tb * O_pad * 4         # live f32 intermediates (h, q)
    )
    vmem_limit = int(min(vmem_bytes + (4 << 20), 64 << 20))  # footprint + margin, v7x-safe

    out_pad = pl.pallas_call(
        kernel,
        out_shape=jax.ShapeDtypeStruct((B, O_pad), out_dtype),
        grid=(n_tiles,),
        in_specs=in_specs,
        out_specs=out_specs,
        compiler_params=pltpu.CompilerParams(
            dimension_semantics=("parallel",),
            vmem_limit_bytes=vmem_limit,
        ),
    )(x_c, w1, b1, w2, b2)

    return out_pad[:, :O]


def _reference_forward(x, w1a, b1a, w2a, b2a, w1v, b1v, w2v, b2v):
    h_a = jnp.maximum(x @ w1a + b1a, 0.0)
    adv = h_a @ w2a + b2a                                   # (B, O)
    h_v = jnp.maximum(x @ w1v + b1v, 0.0)
    v = h_v @ w2v + b2v                                     # (B, 1)
    return v + adv - adv.mean(-1, keepdims=True)            # dueling combine


if __name__ == "__main__":
    # Small deterministic setup consistent with DuelNetwork.__init__ (noisy=False).
    batch = 2
    input_size = 32
    hidden_size = 32
    output_size = 4

    key = jax.random.PRNGKey(0)
    ks = jax.random.split(key, 9)
    x = jax.random.normal(ks[0], (batch, input_size), dtype=jnp.float32)

    # nn.Linear-style init bounds (1/sqrt(fan_in)); weights stored as (in, out).
    bnd1 = 1.0 / jnp.sqrt(jnp.float32(input_size))
    bnd2 = 1.0 / jnp.sqrt(jnp.float32(hidden_size))
    w1a = jax.random.uniform(ks[1], (input_size, hidden_size), jnp.float32, -bnd1, bnd1)
    b1a = jax.random.uniform(ks[2], (hidden_size,), jnp.float32, -bnd1, bnd1)
    w2a = jax.random.uniform(ks[3], (hidden_size, output_size), jnp.float32, -bnd2, bnd2)
    b2a = jax.random.uniform(ks[4], (output_size,), jnp.float32, -bnd2, bnd2)
    w1v = jax.random.uniform(ks[5], (input_size, hidden_size), jnp.float32, -bnd1, bnd1)
    b1v = jax.random.uniform(ks[6], (hidden_size,), jnp.float32, -bnd1, bnd1)
    w2v = jax.random.uniform(ks[7], (hidden_size, 1), jnp.float32, -bnd2, bnd2)
    b2v = jax.random.uniform(ks[8], (1,), jnp.float32, -bnd2, bnd2)

    params = (w1a, b1a, w2a, b2a, w1v, b1v, w2v, b2v)

    # 1) Spec-sized check (B=2, single ragged tile), f32 matmuls, tight tolerance.
    ref = _reference_forward(x, *params)
    out = jax.block_until_ready(
        duel_network_forward(x, *params, compute_dtype=jnp.float32))
    assert out.shape == (batch, output_size)
    assert jnp.allclose(out, ref, atol=1e-4, rtol=1e-4)

    # 2) Ragged multi-tile batch grid (3 tiles, partial last tile), f32.
    big_b = 300
    xb = jax.random.normal(jax.random.PRNGKey(1), (big_b, input_size), dtype=jnp.float32)
    ref_big = _reference_forward(xb, *params)
    out_big = jax.block_until_ready(
        duel_network_forward(xb, *params, block_b=128, compute_dtype=jnp.float32))
    assert out_big.shape == (big_b, output_size)
    assert jnp.allclose(out_big, ref_big, atol=1e-4, rtol=1e-4)

    # 3) Default path: bf16 MXU inputs with f32 accumulation; default block_b exercises the
    #    ">= 2 grid tiles" v7x rule (tb capped to 160 -> 2 grid steps).
    out_bf16 = jax.block_until_ready(duel_network_forward(xb, *params))
    assert jnp.allclose(out_bf16, ref_big, atol=5e-2, rtol=5e-2)

    # 4) bf16 output stream (halves q writeback bytes; lane width stays 128 so stores
    #    remain unmasked).
    out_bf16_o = jax.block_until_ready(
        duel_network_forward(xb, *params, out_dtype=jnp.bfloat16))
    assert jnp.allclose(out_bf16_o.astype(jnp.float32), ref_big, atol=5e-2, rtol=5e-2)

    print("KERNEL_OK")
</pallas_src>

<mosaic_0001>
module attributes {stable_mosaic.version = 11 : i64} {
  func.func @kernel(%arg0: i32, %arg1: memref<8x32xf32, #tpu.memory_space<vmem>>, %arg2: memref<32x256xf32, #tpu.memory_space<vmem>>, %arg3: memref<1x256xf32, #tpu.memory_space<vmem>>, %arg4: memref<256x128xf32, #tpu.memory_space<vmem>>, %arg5: memref<1x128xf32, #tpu.memory_space<vmem>>, %arg6: memref<8x128xf32, #tpu.memory_space<vmem>>) attributes {dimension_semantics = [#tpu.dimension_semantics<parallel>], iteration_bounds = array<i64: 1>, scalar_prefetch = 0 : i64, scratch_operands = 0 : i64, tpu.core_type = #tpu.core_type<tc>, window_params = [{transform_indices = @transform_0, window_bounds = array<i64: 8, 32>}, {pipeline_mode = #tpu.pipeline_mode<synchronous>, transform_indices = @transform_1, window_bounds = array<i64: 32, 256>}, {pipeline_mode = #tpu.pipeline_mode<synchronous>, transform_indices = @transform_2, window_bounds = array<i64: 1, 256>}, {pipeline_mode = #tpu.pipeline_mode<synchronous>, transform_indices = @transform_3, window_bounds = array<i64: 256, 128>}, {pipeline_mode = #tpu.pipeline_mode<synchronous>, transform_indices = @transform_4, window_bounds = array<i64: 1, 128>}, {transform_indices = @transform_5, window_bounds = array<i64: 8, 128>}]} {
    %c0 = arith.constant 0 : index
    %c0_0 = arith.constant 0 : index
    %0 = vector.load %arg1[%c0, %c0_0] : memref<8x32xf32, #tpu.memory_space<vmem>>, vector<8x32xf32>
    %c0_1 = arith.constant 0 : index
    %c0_2 = arith.constant 0 : index
    %1 = vector.load %arg2[%c0_1, %c0_2] : memref<32x256xf32, #tpu.memory_space<vmem>>, vector<32x256xf32>
    %cst = arith.constant dense<0.000000e+00> : vector<8x256xf32>
    %2 = tpu.matmul %0, %1, %cst {dimension_numbers = #tpu.dot_dimension_numbers<[1], [0], [0], [1], [0, 0, 1, 1], [], []>} : vector<8x32xf32>, vector<32x256xf32>, vector<8x256xf32> -> vector<8x256xf32>
    %c0_3 = arith.constant 0 : index
    %c0_4 = arith.constant 0 : index
    %3 = vector.load %arg3[%c0_3, %c0_4] : memref<1x256xf32, #tpu.memory_space<vmem>>, vector<1x256xf32>
    %4 = vector.broadcast %3 : vector<1x256xf32> to vector<8x256xf32>
    %5 = arith.addf %2, %4 : vector<8x256xf32>
    %cst_5 = arith.constant 0.000000e+00 : f32
    %6 = vector.broadcast %cst_5 : f32 to vector<8x256xf32>
    %7 = arith.maximumf %5, %6 : vector<8x256xf32>
    %c0_6 = arith.constant 0 : index
    %c0_7 = arith.constant 0 : index
    %8 = vector.load %arg4[%c0_6, %c0_7] : memref<256x128xf32, #tpu.memory_space<vmem>>, vector<256x128xf32>
    %cst_8 = arith.constant dense<0.000000e+00> : vector<8x128xf32>
    %9 = tpu.matmul %7, %8, %cst_8 {dimension_numbers = #tpu.dot_dimension_numbers<[1], [0], [0], [1], [0, 0, 1, 1], [], []>} : vector<8x256xf32>, vector<256x128xf32>, vector<8x128xf32> -> vector<8x128xf32>
    %c0_9 = arith.constant 0 : index
    %c0_10 = arith.constant 0 : index
    %10 = vector.load %arg5[%c0_9, %c0_10] : memref<1x128xf32, #tpu.memory_space<vmem>>, vector<1x128xf32>
    %11 = vector.broadcast %10 : vector<1x128xf32> to vector<8x128xf32>
    %12 = arith.addf %9, %11 : vector<8x128xf32>
    %c0_11 = arith.constant 0 : index
    %c0_12 = arith.constant 0 : index
    %13 = vector.load %arg6[%c0_11, %c0_12] : memref<8x128xf32, #tpu.memory_space<vmem>>, vector<8x128xf32>
    tpu.vector_store %arg6[%c0_11, %c0_12], %12 {strides = array<i32>} : memref<8x128xf32, #tpu.memory_space<vmem>>, vector<8x128xf32>,
    return
  }
  func.func @transform_0(%arg0: i32) -> (i32, i32) {
    %c0_i32 = arith.constant 0 : i32
    %c0_i32_0 = arith.constant 0 : i32
    return %arg0, %c0_i32 : i32, i32
  }
  func.func @transform_1(%arg0: i32) -> (i32, i32) {
    %c0_i32 = arith.constant 0 : i32
    %c0_i32_0 = arith.constant 0 : i32
    %c0_i32_1 = arith.constant 0 : i32
    return %c0_i32, %c0_i32_0 : i32, i32
  }
  func.func @transform_2(%arg0: i32) -> (i32, i32) {
    %c0_i32 = arith.constant 0 : i32
    %c0_i32_0 = arith.constant 0 : i32
    %c0_i32_1 = arith.constant 0 : i32
    return %c0_i32, %c0_i32_0 : i32, i32
  }
  func.func @transform_3(%arg0: i32) -> (i32, i32) {
    %c0_i32 = arith.constant 0 : i32
    %c0_i32_0 = arith.constant 0 : i32
    %c0_i32_1 = arith.constant 0 : i32
    return %c0_i32, %c0_i32_0 : i32, i32
  }
  func.func @transform_4(%arg0: i32) -> (i32, i32) {
    %c0_i32 = arith.constant 0 : i32
    %c0_i32_0 = arith.constant 0 : i32
    %c0_i32_1 = arith.constant 0 : i32
    return %c0_i32, %c0_i32_0 : i32, i32
  }
  func.func @transform_5(%arg0: i32) -> (i32, i32) {
    %c0_i32 = arith.constant 0 : i32
    %c0_i32_0 = arith.constant 0 : i32
    return %arg0, %c0_i32 : i32, i32
  }
}

</mosaic_0001>

<llo_original>
// kernel: tpu_custom_call.1
$region0: #{tpu_custom_call.1}
  #allocation0 [shape = 'u32[]', space=smem, size = 0x4, offset = 0x4, fixed_abs, tag = 'smem constant byte address 0x4 - core index']
  #allocation1 [shape = 'u32[72,128]{1,0:T(1,128)}', space=vmem, size = 0x9000, scoped, tag = 'internal scratch']
  %s0 = inlined_call_operand.hbm [shape: f32[2,32], index: 0, kind: input, shape index: {}]
  %s1 = inlined_call_operand.hbm [shape: f32[32,256], index: 1, kind: input, shape index: {}]
  %s2 = inlined_call_operand.hbm [shape: f32[1,256], index: 2, kind: input, shape index: {}]
  %s3 = inlined_call_operand.hbm [shape: f32[256,128], index: 3, kind: input, shape index: {}]
  %s4 = inlined_call_operand.vmem [shape: f32[1,128], index: 4, kind: input, shape index: {}]
  %s5 = inlined_call_operand.hbm [shape: f32[2,128], index: 5, kind: output, shape index: {}]
  %s6 = sld [smem:[#allocation0]]
  $region46: #{tpu_custom_call.1} parent=0
    _
  %s8 = ssub.s32 1, %s6
  %s9 = scalar_select 0, %s8, %s6
  $region1: #{tpu_custom_call.1} parent=0
    #allocation2 [shape = 'u8[4096]{0}', space=vmem, size = 0x1000, scoped, tag = 'input window, operand 0, single buffered']
    #allocation3 [shape = 's32[1]{0}', space=sflag, size = 0x4, scoped, tag = 'scoped memory for tpu_custom_call.1']
    #allocation4 [shape = 's32[1]{0}', space=sflag, size = 0x4, scoped, tag = 'scoped memory for tpu_custom_call.1']
    #allocation5 [shape = 'u8[32768]{0}', space=vmem, size = 0x8000, scoped, tag = 'input window, operand 1, single buffered']
    #allocation6 [shape = 's32[1]{0}', space=sflag, size = 0x4, scoped, tag = 'scoped memory for tpu_custom_call.1']
    #allocation7 [shape = 'u8[1024]{0}', space=vmem, size = 0x400, scoped, tag = 'input window, operand 2, single buffered']
    #allocation8 [shape = 'u8[131072]{0}', space=vmem, size = 0x20000, scoped, tag = 'input window, operand 3, single buffered']
    #allocation9 [shape = 's32[1]{0}', space=sflag, size = 0x4, scoped, tag = 'scoped memory for tpu_custom_call.1']
    #allocation10 [shape = 'u8[4096]{0}', space=vmem, size = 0x1000, scoped, tag = 'output window, operand 0, single buffered']
    %10 = vsyncpa [#allocation3], 0
    %11 = vsyncpa [#allocation6], 0
    %12 = vsyncpa [#allocation9], 0
    %13 = vsyncpa [#allocation4], 0
    // Predicated region
    $region2: #{tpu_custom_call.1} parent=1 // pred_check
      _
    $region3: #{tpu_custom_call.1} parent=1 // pred_check_branch
      %15 = sbr.rel (0) target = $region5
    $region4: #{tpu_custom_call.1} parent=1 // pred_region
      %17 = vsyncadd [#allocation3], 96
      %s18 = sshll.u32 %s0, 4
      %s19 = int_to_ptr.hbm [resolvable:$true] %s18
      %s20 = sshll.u32 [#allocation2], 4
      %s21 = int_to_ptr.vmem [resolvable:$true] %s20
      %26 = dma.hbm_to_vmem [thread:$0]  %s19, 32, %s21, [#allocation3], 32, 32, 2
    $region5: #{tpu_custom_call.1} parent=1 // pred_fallthru
      _
    // Predicated region
    $region6: #{tpu_custom_call.1} parent=1 // pred_check
      _
    $region7: #{tpu_custom_call.1} parent=1 // pred_check_branch
      %28 = sbr.rel (0) target = $region9
    $region8: #{tpu_custom_call.1} parent=1 // pred_region
      %30 = vsyncadd [#allocation6], 0
      %s31 = sshll.u32 %s1, 4
      %s32 = int_to_ptr.hbm [resolvable:$true] %s31
      %s33 = sshll.u32 [#allocation5], 4
      %s34 = int_to_ptr.vmem [resolvable:$true] %s33
      %39 = dma.hbm_to_vmem [thread:$0]  %s32, 1024, %s34, [#allocation6], 256, 256, 16
    $region9: #{tpu_custom_call.1} parent=1 // pred_fallthru
      _
    // Predicated region
    $region10: #{tpu_custom_call.1} parent=1 // pred_check
      _
    $region11: #{tpu_custom_call.1} parent=1 // pred_check_branch
      %41 = sbr.rel (0) target = $region13
    $region12: #{tpu_custom_call.1} parent=1 // pred_region
      %43 = vsyncadd [#allocation6], 0
      %s45 = sshll.u32 %s2, 4
      %s46 = int_to_ptr.hbm [resolvable:$true] %s45
      %s47 = sshll.u32 [#allocation7], 4
      %s48 = int_to_ptr.vmem [resolvable:$true] %s47
      %50 = dma.hbm_to_vmem [thread:$0]  %s46, 32, %s48, [#allocation6]
    $region13: #{tpu_custom_call.1} parent=1 // pred_fallthru
      _
    // Predicated region
    $region14: #{tpu_custom_call.1} parent=1 // pred_check
      _
    $region15: #{tpu_custom_call.1} parent=1 // pred_check_branch
      %52 = sbr.rel (0) target = $region17
    $region16: #{tpu_custom_call.1} parent=1 // pred_region
      %54 = vsyncadd [#allocation9], 0
      %s55 = sshll.u32 %s3, 4
      %s56 = int_to_ptr.hbm [resolvable:$true] %s55
      %s57 = sshll.u32 [#allocation8], 4
      %s58 = int_to_ptr.vmem [resolvable:$true] %s57
      %63 = dma.hbm_to_vmem [thread:$0]  %s56, 4096, %s58, [#allocation9], 128, 128, 8
    $region17: #{tpu_custom_call.1} parent=1 // pred_fallthru
      _
    // Predicated region
    $region18: #{tpu_custom_call.1} parent=1 // pred_check
      _
    $region19: #{tpu_custom_call.1} parent=1 // pred_check_branch
      %65 = sbr.rel (0) target = $region21
    $region20: #{tpu_custom_call.1} parent=1 // pred_region
      _
    $region21: #{tpu_custom_call.1} parent=1 // pred_fallthru
      _
    // Predicated region
    $region22: #{tpu_custom_call.1} parent=1 // pred_check
      _
    $region23: #{tpu_custom_call.1} parent=1 // pred_check_branch
      %67 = sbr.rel (0) target = $region25
    $region24: #{tpu_custom_call.1} parent=1 // pred_region
      %69 = dma.done [#allocation3], 128
    $region25: #{tpu_custom_call.1} parent=1 // pred_fallthru
      _
    // Predicated region
    $region26: #{tpu_custom_call.1} parent=1 // pred_check
      _
    $region27: #{tpu_custom_call.1} parent=1 // pred_check_branch
      %71 = sbr.rel (0) target = $region29
    $region28: #{tpu_custom_call.1} parent=1 // pred_region
      %73 = dma.done [#allocation6], 1024
    $region29: #{tpu_custom_call.1} parent=1 // pred_fallthru
      _
    // Predicated region
    $region30: #{tpu_custom_call.1} parent=1 // pred_check
      _
    $region31: #{tpu_custom_call.1} parent=1 // pred_check_branch
      %75 = sbr.rel (0) target = $region33
    $region32: #{tpu_custom_call.1} parent=1 // pred_region
      %77 = dma.done [#allocation6], 32
    $region33: #{tpu_custom_call.1} parent=1 // pred_fallthru
      _
    // Predicated region
    $region34: #{tpu_custom_call.1} parent=1 // pred_check
      _
    $region35: #{tpu_custom_call.1} parent=1 // pred_check_branch
      %79 = sbr.rel (0) target = $region37
    $region36: #{tpu_custom_call.1} parent=1 // pred_region
      %81 = dma.done [#allocation9], 4096
    $region37: #{tpu_custom_call.1} parent=1 // pred_fallthru
      _
    %v82 = vld [vmem:[#allocation2] sm:$0xff]
    %v83 = vld [vmem:[#allocation5] sm:$0xff]
    %v84 = vld [vmem:[#allocation5 + $0x8] sm:$0xff]
    %v85 = vld [vmem:[#allocation5 + $0x10] sm:$0xff]
    %v86 = vld [vmem:[#allocation5 + $0x18] sm:$0xff]
    %v87 = vld [vmem:[#allocation5 + $0x20] sm:$0xff]
    %v88 = vld [vmem:[#allocation5 + $0x28] sm:$0xff]
    %v89 = vld [vmem:[#allocation5 + $0x30] sm:$0xff]
    %v90 = vld [vmem:[#allocation5 + $0x38] sm:$0xff]
    %v91 = vld [vmem:[#allocation7] sm:$0x3]
    %v93 = vperm.slane %v91, 0
    %v94 = vperm.slane %v91, 1
    %vm97 = vcmask 261120
    %v99 = vsel %vm97, %v82, 0
    %101 = vmatpush.msra.mxu0 0.0
    %102 = vmatpush.msra.mxu0 0.0
    %103 = vmatpush.msra.mxu0 0.0
    %104 = vmatpush.msra.mxu0 0.0
    %105 = vmatpush.msra.mxu0 0.0
    %106 = vmatpush.msra.mxu0 0.0
    %107 = vmatpush.msra.mxu0 0.0
    %108 = vmatpush.msra.mxu0 0.0
    %109 = vmatpush.msra.mxu0 0.0
    %110 = vmatpush.msra.mxu0 0.0
    %111 = vmatpush.msra.mxu0 0.0
    %112 = vmatpush.msra.mxu0 0.0
    %113 = vmatpush.msra.mxu0 %v89
    %114 = vmatpush.msra.mxu0 %v87
    %115 = vmatpush.msra.mxu0 %v85
    %116 = vmatpush.msra.mxu0 %v83
    %117 = vmatmul.f32.gmra.mxu0 %v99
    %v118 = vpop.f32.mrf.mxu0
    %v119 = vadd.f32 %v93, %v118
    %120 = vdwg.mxu0
    %121 = vmatpush.msra.mxu0 0.0
    %122 = vmatpush.msra.mxu0 0.0
    %123 = vmatpush.msra.mxu0 0.0
    %124 = vmatpush.msra.mxu0 0.0
    %125 = vmatpush.msra.mxu0 0.0
    %126 = vmatpush.msra.mxu0 0.0
    %127 = vmatpush.msra.mxu0 0.0
    %128 = vmatpush.msra.mxu0 0.0
    %129 = vmatpush.msra.mxu0 0.0
    %130 = vmatpush.msra.mxu0 0.0
    %131 = vmatpush.msra.mxu0 0.0
    %132 = vmatpush.msra.mxu0 0.0
    %133 = vmatpush.msra.mxu0 %v90
    %134 = vmatpush.msra.mxu0 %v88
    %135 = vmatpush.msra.mxu0 %v86
    %136 = vmatpush.msra.mxu0 %v84
    %137 = vmatmul.f32.gmra.mxu0 %v99
    %v138 = vpop.f32.mrf.mxu0
    %v139 = vadd.f32 %v94, %v138
    %140 = vdwg.mxu0
    %v141 = vmax.f32 %v119, 0.0
    %v142 = vmax.f32 %v139, 0.0
    %v143 = vld [vmem:[#allocation8] sm:$0xff]
    %v144 = vld [vmem:[#allocation8 + $0x8] sm:$0xff]
    %v145 = vld [vmem:[#allocation8 + $0x10] sm:$0xff]
    %v146 = vld [vmem:[#allocation8 + $0x18] sm:$0xff]
    %v147 = vld [vmem:[#allocation8 + $0x20] sm:$0xff]
    %v148 = vld [vmem:[#allocation8 + $0x28] sm:$0xff]
    %v149 = vld [vmem:[#allocation8 + $0x30] sm:$0xff]
    %v150 = vld [vmem:[#allocation8 + $0x38] sm:$0xff]
    %v151 = vld [vmem:[#allocation8 + $0x40] sm:$0xff]
    %v152 = vld [vmem:[#allocation8 + $0x48] sm:$0xff]
    %v153 = vld [vmem:[#allocation8 + $0x50] sm:$0xff]
    %v154 = vld [vmem:[#allocation8 + $0x58] sm:$0xff]
    %v155 = vld [vmem:[#allocation8 + $0x60] sm:$0xff]
    %v156 = vld [vmem:[#allocation8 + $0x68] sm:$0xff]
    %v157 = vld [vmem:[#allocation8 + $0x70] sm:$0xff]
    %v158 = vld [vmem:[#allocation8 + $0x78] sm:$0xff]
    %v159 = vld [vmem:[#allocation8 + $0x80] sm:$0xff]
    %v160 = vld [vmem:[#allocation8 + $0x88] sm:$0xff]
    %v161 = vld [vmem:[#allocation8 + $0x90] sm:$0xff]
    %v162 = vld [vmem:[#allocation8 + $0x98] sm:$0xff]
    %v163 = vld [vmem:[#allocation8 + $0xa0] sm:$0xff]
    %v164 = vld [vmem:[#allocation8 + $0xa8] sm:$0xff]
    %v165 = vld [vmem:[#allocation8 + $0xb0] sm:$0xff]
    %v166 = vld [vmem:[#allocation8 + $0xb8] sm:$0xff]
    %v167 = vld [vmem:[#allocation8 + $0xc0] sm:$0xff]
    %v168 = vld [vmem:[#allocation8 + $0xc8] sm:$0xff]
    %v169 = vld [vmem:[#allocation8 + $0xd0] sm:$0xff]
    %v170 = vld [vmem:[#allocation8 + $0xd8] sm:$0xff]
    %v171 = vld [vmem:[#allocation8 + $0xe0] sm:$0xff]
    %v172 = vld [vmem:[#allocation8 + $0xe8] sm:$0xff]
    %v173 = vld [vmem:[#allocation8 + $0xf0] sm:$0xff]
    %v174 = vld [vmem:[#allocation8 + $0xf8] sm:$0xff]
    %v175 = vld [vmem:[%s4] sm:$0x1]
    %v177 = vperm.slane %v175, 0
    %179 = vmatpush.msra.mxu0 %v158
    %180 = vmatpush.msra.mxu0 %v157
    %181 = vmatpush.msra.mxu0 %v156
    %182 = vmatpush.msra.mxu0 %v155
    %183 = vmatpush.msra.mxu0 %v154
    %184 = vmatpush.msra.mxu0 %v153
    %185 = vmatpush.msra.mxu0 %v152
    %186 = vmatpush.msra.mxu0 %v151
    %187 = vmatpush.msra.mxu0 %v150
    %188 = vmatpush.msra.mxu0 %v149
    %189 = vmatpush.msra.mxu0 %v148
    %190 = vmatpush.msra.mxu0 %v147
    %191 = vmatpush.msra.mxu0 %v146
    %192 = vmatpush.msra.mxu0 %v145
    %193 = vmatpush.msra.mxu0 %v144
    %194 = vmatpush.msra.mxu0 %v143
    %195 = vmatmul.f32.gmra.mxu0 %v141
    %v196 = vpop.f32.mrf.mxu0
    %v197 = vadd.f32 %v177, %v196
    %198 = vdwg.mxu0
    %199 = vmatpush.msra.mxu0 %v174
    %200 = vmatpush.msra.mxu0 %v173
    %201 = vmatpush.msra.mxu0 %v172
    %202 = vmatpush.msra.mxu0 %v171
    %203 = vmatpush.msra.mxu0 %v170
    %204 = vmatpush.msra.mxu0 %v169
    %205 = vmatpush.msra.mxu0 %v168
    %206 = vmatpush.msra.mxu0 %v167
    %207 = vmatpush.msra.mxu0 %v166
    %208 = vmatpush.msra.mxu0 %v165
    %209 = vmatpush.msra.mxu0 %v164
    %210 = vmatpush.msra.mxu0 %v163
    %211 = vmatpush.msra.mxu0 %v162
    %212 = vmatpush.msra.mxu0 %v161
    %213 = vmatpush.msra.mxu0 %v160
    %214 = vmatpush.msra.mxu0 %v159
    %215 = vmatmul.f32.gmra.mxu0 %v142
    %v216 = vpop.f32.mrf.mxu0
    %v217 = vadd.f32 %v197, %v216
    %218 = vdwg.mxu0
    %219 = vst [vmem:[#allocation10] sm:$0xff] %v217
    // Predicated region
    $region38: #{tpu_custom_call.1} parent=1 // pred_check
      _
    $region39: #{tpu_custom_call.1} parent=1 // pred_check_branch
      %221 = sbr.rel (0) target = $region41
    $region40: #{tpu_custom_call.1} parent=1 // pred_region
      %223 = vsyncadd [#allocation4], 96
      %s224 = sshll.u32 [#allocation10], 4
      %s225 = int_to_ptr.vmem [resolvable:$true] %s224
      %s226 = sshll.u32 %s5, 4
      %s227 = int_to_ptr.hbm [resolvable:$true] %s226
      %232 = dma.vmem_to_hbm [thread:$0]  %s225, 32, %s227, [#allocation4], 32, 32, 2
    $region41: #{tpu_custom_call.1} parent=1 // pred_fallthru
      _
    // Predicated region
    $region42: #{tpu_custom_call.1} parent=1 // pred_check
      _
    $region43: #{tpu_custom_call.1} parent=1 // pred_check_branch
      %234 = sbr.rel (0) target = $region45
    $region44: #{tpu_custom_call.1} parent=1 // pred_region
      %236 = dma.done [#allocation4], 128
    $region45: #{tpu_custom_call.1} parent=1 // pred_fallthru
      _
    %237 = vsyncpa [#allocation3], 1
    %238 = vsyncpa [#allocation6], 1
    %239 = vsyncpa [#allocation9], 1
    %240 = vsyncpa [#allocation4], 1

</llo_original>
